<compile_context>
chip_gen: v7x
topology: tpu7x:2x2x1
jax: 0.10.0
libtpu: 0.0.40
codegen_flags: <defaults>
</compile_context>

<pallas_src>
import math

import jax
import jax.numpy as jnp
from jax import lax
from jax.experimental import pallas as pl
from jax.experimental.pallas import tpu as pltpu


def _make_kernel(has_mask, has_qmask, qmask_native, inv_sqrt_dk):
    """Build a kernel variant specialized for the mask configuration."""

    def kernel(*refs):
        q_ref, k_ref, v_ref = refs[0], refs[1], refs[2]
        idx = 3
        mask_ref = None
        qmask_ref = None
        if has_mask:
            mask_ref = refs[idx]
            idx += 1
        if has_qmask:
            qmask_ref = refs[idx]
            idx += 1
        out_ref, attn_ref = refs[idx], refs[idx + 1]

        q = q_ref[...]                                  # (GH, TQ, D)
        k = k_ref[...]                                  # (GH, Lk, D)
        v = v_ref[...]                                  # (GH, Lk, D)

        # attention = matmul(query / sqrt(dim_key), key^T)
        # Contract the last dims of q and k directly -> no materialized k.T.
        q_scaled = q * jnp.asarray(inv_sqrt_dk, dtype=q.dtype)
        scores = lax.dot_general(
            q_scaled, k,
            dimension_numbers=(((2,), (2,)), ((0,), (0,))),
            preferred_element_type=jnp.float32)         # (GH, TQ, Lk) fp32

        if has_mask:
            # masked_fill(mask == 0, -1e9); the tile broadcasts over GH when the
            # mask is head-broadcast (leading block dim == 1).
            scores = jnp.where(mask_ref[...] == 0, jnp.float32(-1e9), scores)

        # Numerically stable softmax over the last dim (fp32 math).
        m = jnp.max(scores, axis=-1, keepdims=True)
        e = jnp.exp(scores - m)
        attn = e * pl.reciprocal(jnp.sum(e, axis=-1, keepdims=True), approx=True)

        if has_qmask:
            qm = qmask_ref[...]
            if qmask_native:
                # query_mask streamed in its native (.., Lk, TQ) layout; the
                # tile transpose rides the XLU slot (effectively free here).
                qm = jnp.swapaxes(qm, -1, -2)
            attn = attn * qm.astype(jnp.float32)

        # TODO(synk): nn.Dropout(attention_dropout) -- identity in eval mode.

        attn_lp = attn.astype(v.dtype)                  # single cast, reused
        attn_ref[...] = attn_lp.astype(attn_ref.dtype)  # no-op when dtypes match
        out = lax.dot_general(
            attn_lp, v,
            dimension_numbers=(((2,), (1,)), ((0,), (0,))),
            preferred_element_type=jnp.float32)         # (GH, TQ, D)
        out_ref[...] = out.astype(out_ref.dtype)

    return kernel


def _sublane_multiple(dtype):
    # Minimum sublane tile for packed dtypes: fp32 -> 8, bf16 -> 16, int8 -> 32.
    return 8 * max(1, 4 // jnp.dtype(dtype).itemsize)


def _prep_mask(m):
    # bool -> int8 (exact for 0/1, smallest Pallas-friendly dtype); everything
    # else streams at its native dtype -- no wrapper-side cast pass over HBM.
    if m.dtype == jnp.bool_:
        return m.astype(jnp.int8)
    return m


def attention_forward(query, key, value, dim_key, mask=None, query_mask=None):
    """Pallas equivalent of Attention.forward (inference; dropout = identity).

    query: (B, H, Lq, D); key/value: (B, H, Lk, D)
    mask:       optional (B, H, Lq, Lk) or (B, 1, Lq, Lk); 0 = masked position.
    query_mask: optional (B, H, Lk, Lq) or (B, 1, Lk, Lq); multiplied after
                transpose(2, 3), as in the PyTorch module.
    Returns (output (B, H, Lq, D), attention (B, H, Lq, Lk)) in the promoted
    dtype of (query, key, value).
    """
    B, H, Lq, D = query.shape
    Lk = key.shape[2]
    BH = B * H

    compute_dtype = jnp.result_type(query.dtype, key.dtype, value.dtype)
    out_dtype = compute_dtype

    qf = query.astype(compute_dtype).reshape(BH, Lq, D)   # no-op cast if same dtype
    kf = key.astype(compute_dtype).reshape(BH, Lk, D)
    vf = value.astype(compute_dtype).reshape(BH, Lk, D)

    has_mask = mask is not None
    has_qmask = query_mask is not None
    mask_a = _prep_mask(mask) if has_mask else None
    qmask_a = _prep_mask(query_mask) if has_qmask else None
    mask_bcast = has_mask and H > 1 and mask_a.shape[1] == 1
    qmask_bcast = has_qmask and H > 1 and qmask_a.shape[1] == 1

    in_isz = jnp.dtype(compute_dtype).itemsize
    out_isz = jnp.dtype(out_dtype).itemsize
    mask_isz = jnp.dtype(mask_a.dtype).itemsize if has_mask else 0
    qmask_isz = jnp.dtype(qmask_a.dtype).itemsize if has_qmask else 0

    # ---- per-generation VMEM budget ----------------------------------------
    try:
        vmem_cap = int(pltpu.get_tpu_info().vmem_capacity_bytes)
    except Exception:                       # conservative (v7x-sized) fallback
        vmem_cap = 64 * 1024 * 1024
    budget = (vmem_cap * 45) // 100         # ~57 MiB on 128 MiB parts, ~28 MiB on v7x

    def step_bytes(gh, tq):
        """Approximate VMEM footprint of one pipelined grid step."""
        mgh = 1 if mask_bcast else gh
        qgh = 1 if qmask_bcast else gh
        io = gh * tq * D * in_isz                 # q tile
        io += 2 * gh * Lk * D * in_isz            # k + v (head-resident blocks)
        if has_mask:
            io += mgh * tq * Lk * mask_isz
        if has_qmask:
            io += qgh * tq * Lk * qmask_isz
        io += gh * tq * D * out_isz               # output tile
        io += gh * tq * Lk * out_isz              # attention tile
        # In-body intermediates: scores, e, attn in fp32 (the row reductions
        # break fusion so they coexist), the low-precision attn copy, and the
        # transposed/f32 query-mask tile.
        scratch = 3 * gh * tq * Lk * 4
        scratch += gh * tq * Lk * out_isz
        if has_qmask:
            scratch += qgh * tq * Lk * 4
        return 2 * io + scratch                   # 2x: double-buffered pipeline

    # ---- joint (GH, TQ) selection against the budget ------------------------
    dts = [compute_dtype, out_dtype]
    if has_mask:
        dts.append(mask_a.dtype)
    if has_qmask:
        dts.append(qmask_a.dtype)
    min_tq = max(_sublane_multiple(d) for d in dts)
    tq_cands = [c for c in (1024, 512, 256, 128, 64, 32, 16, 8)
                if c <= Lq and Lq % c == 0 and c % min_tq == 0]
    if Lq not in tq_cands:
        tq_cands.append(Lq)                       # full extent is always legal
    need_gh_div_h = mask_bcast or qmask_bcast

    def choose(require_lane_tq):
        best = None
        for tq in tq_cands:
            # Native-layout query_mask puts TQ in the lane position: it must be
            # a multiple of 128 or the full Lq extent.
            if require_lane_tq and tq % 128 != 0 and tq != Lq:
                continue
            for gh in range(1, BH + 1):
                if BH % gh:
                    continue
                if need_gh_div_h and (gh > H or H % gh):
                    continue
                if step_bytes(gh, tq) > budget:
                    continue
                # Prefer >= 2 head-groups so v7x can shard the leading
                # ("parallel") axis across both TensorCores; then biggest tile.
                shard_ok = 1 if (BH < 2 or BH // gh >= 2) else 0
                key_ = (shard_ok, gh * tq, tq)
                if best is None or key_ > best[0]:
                    best = (key_, gh, tq)
        return best

    qmask_native = has_qmask
    sel = choose(require_lane_tq=has_qmask)
    if sel is None and has_qmask:
        qmask_native = False                      # fall back to wrapper transpose
        sel = choose(require_lane_tq=False)
    if sel is not None:
        _, GH, TQ = sel
    else:
        # Nothing fits the budget: smallest legal tile; stretch vmem limit.
        # TODO(synk): add an Lk grid axis + two-pass softmax for configurations
        # whose single head-group footprint exceeds physical VMEM (v7x, long Lk).
        qmask_native = False
        GH = 1
        TQ = min(tq_cands)

    grid = (BH // GH, Lq // TQ)
    need = step_bytes(GH, TQ)
    vmem_limit = int(min(max(need + need // 4, 32 * 1024 * 1024),
                         vmem_cap - 8 * 1024 * 1024))

    def _head_to_batch(h):                        # head-group -> batch block index
        return (h * GH) // H

    # ---- operands & BlockSpecs ----------------------------------------------
    operands = [qf, kf, vf]
    in_specs = [
        pl.BlockSpec((GH, TQ, D), lambda h, i: (h, i, 0)),   # query tile
        pl.BlockSpec((GH, Lk, D), lambda h, i: (h, 0, 0)),   # key   (head-resident)
        pl.BlockSpec((GH, Lk, D), lambda h, i: (h, 0, 0)),   # value (head-resident)
    ]

    if has_mask:
        if mask_bcast:
            operands.append(mask_a.reshape(B, Lq, Lk))
            in_specs.append(pl.BlockSpec(
                (1, TQ, Lk), lambda h, i: (_head_to_batch(h), i, 0)))
        else:
            operands.append(
                jnp.broadcast_to(mask_a, (B, H, Lq, Lk)).reshape(BH, Lq, Lk))
            in_specs.append(pl.BlockSpec((GH, TQ, Lk), lambda h, i: (h, i, 0)))

    if has_qmask:
        if qmask_native:
            # Stream query_mask in its native (.., Lk, Lq) layout; the per-tile
            # transpose happens in-kernel (XLU) instead of a wrapper HBM pass.
            if qmask_bcast:
                operands.append(qmask_a.reshape(B, Lk, Lq))
                in_specs.append(pl.BlockSpec(
                    (1, Lk, TQ), lambda h, i: (_head_to_batch(h), 0, i)))
            else:
                operands.append(
                    jnp.broadcast_to(qmask_a, (B, H, Lk, Lq)).reshape(BH, Lk, Lq))
                in_specs.append(pl.BlockSpec((GH, Lk, TQ), lambda h, i: (h, 0, i)))
        else:
            # Fallback only when no lane-legal TQ fits VMEM.
            qm_t = jnp.swapaxes(qmask_a, -1, -2)
            if qmask_bcast:
                operands.append(qm_t.reshape(B, Lq, Lk))
                in_specs.append(pl.BlockSpec(
                    (1, TQ, Lk), lambda h, i: (_head_to_batch(h), i, 0)))
            else:
                operands.append(
                    jnp.broadcast_to(qm_t, (B, H, Lq, Lk)).reshape(BH, Lq, Lk))
                in_specs.append(pl.BlockSpec((GH, TQ, Lk), lambda h, i: (h, i, 0)))

    out_specs = [
        pl.BlockSpec((GH, TQ, D), lambda h, i: (h, i, 0)),    # output
        pl.BlockSpec((GH, TQ, Lk), lambda h, i: (h, i, 0)),   # attention
    ]

    kernel = _make_kernel(has_mask, has_qmask, qmask_native,
                          1.0 / math.sqrt(dim_key))

    out_f, attn_f = pl.pallas_call(
        kernel,
        out_shape=(
            jax.ShapeDtypeStruct((BH, Lq, D), out_dtype),
            jax.ShapeDtypeStruct((BH, Lq, Lk), out_dtype),
        ),
        grid_spec=pltpu.PrefetchScalarGridSpec(
            num_scalar_prefetch=0,
            grid=grid,
            in_specs=in_specs,
            out_specs=out_specs,
        ),
        compiler_params=pltpu.CompilerParams(
            dimension_semantics=("parallel", "arbitrary"),
            vmem_limit_bytes=vmem_limit),
    )(*operands)

    return out_f.reshape(B, H, Lq, D), attn_f.reshape(B, H, Lq, Lk)


def _reference(query, key, value, dim_key, mask=None, query_mask=None):
    scores = jnp.matmul(query / math.sqrt(dim_key), jnp.swapaxes(key, 2, 3))
    if mask is not None:
        scores = jnp.where(mask == 0, -1e9, scores)
    attn = jax.nn.softmax(scores, axis=-1)
    if query_mask is not None:
        attn = attn * jnp.swapaxes(query_mask, 2, 3)
    out = jnp.matmul(attn, value)
    return out, attn


if __name__ == "__main__":
    B, H, Lq, Lk, D = 2, 2, 8, 8, 32
    dim_key = D

    key0 = jax.random.PRNGKey(0)
    k1, k2, k3, k4, k5, k6 = jax.random.split(key0, 6)

    query = jax.random.normal(k1, (B, H, Lq, D), jnp.float32)
    key_ = jax.random.normal(k2, (B, H, Lk, D), jnp.float32)
    value = jax.random.normal(k3, (B, H, Lk, D), jnp.float32)
    mask = (jax.random.uniform(k4, (B, H, Lq, Lk)) > 0.2).astype(jnp.float32)
    query_mask = (jax.random.uniform(k5, (B, H, Lk, Lq)) > 0.1).astype(jnp.float32)
    bmask = (jax.random.uniform(k6, (B, 1, Lq, Lk)) > 0.2).astype(jnp.float32)

    # 1) full mask + query_mask (native-layout query_mask path, in-kernel transpose)
    out, attn = attention_forward(query, key_, value, dim_key,
                                  mask=mask, query_mask=query_mask)
    jax.block_until_ready((out, attn))
    out_ref, attn_ref = _reference(query, key_, value, dim_key,
                                   mask=mask, query_mask=query_mask)
    assert out.shape == (B, H, Lq, D) and attn.shape == (B, H, Lq, Lk)
    assert jnp.allclose(out, out_ref, atol=2e-3, rtol=2e-3)
    assert jnp.allclose(attn, attn_ref, atol=2e-3, rtol=2e-3)

    # 2) no masks (mask-free kernel specialization)
    out2, attn2 = attention_forward(query, key_, value, dim_key)
    jax.block_until_ready((out2, attn2))
    out2_ref, attn2_ref = _reference(query, key_, value, dim_key)
    assert jnp.allclose(out2, out2_ref, atol=2e-3, rtol=2e-3)
    assert jnp.allclose(attn2, attn2_ref, atol=2e-3, rtol=2e-3)

    # 3) head-broadcast mask (B, 1, Lq, Lk) streamed once per batch
    out3, attn3 = attention_forward(query, key_, value, dim_key, mask=bmask)
    jax.block_until_ready((out3, attn3))
    out3_ref, attn3_ref = _reference(query, key_, value, dim_key, mask=bmask)
    assert jnp.allclose(out3, out3_ref, atol=2e-3, rtol=2e-3)
    assert jnp.allclose(attn3, attn3_ref, atol=2e-3, rtol=2e-3)

    print("KERNEL_OK")
</pallas_src>

<mosaic_0001>
module attributes {stable_mosaic.version = 11 : i64} {
  func.func @kernel(%arg0: i32, %arg1: i32, %arg2: memref<2x8x32xf32, #tpu.memory_space<vmem>>, %arg3: memref<2x8x32xf32, #tpu.memory_space<vmem>>, %arg4: memref<2x8x32xf32, #tpu.memory_space<vmem>>, %arg5: memref<2x8x8xf32, #tpu.memory_space<vmem>>, %arg6: memref<2x8x8xf32, #tpu.memory_space<vmem>>, %arg7: memref<2x8x32xf32, #tpu.memory_space<vmem>>, %arg8: memref<2x8x8xf32, #tpu.memory_space<vmem>>) attributes {dimension_semantics = [#tpu.dimension_semantics<parallel>, #tpu.dimension_semantics<arbitrary>], iteration_bounds = array<i64: 2, 1>, scalar_prefetch = 0 : i64, scratch_operands = 0 : i64, tpu.core_type = #tpu.core_type<tc>, window_params = [{transform_indices = @transform_0, window_bounds = array<i64: 2, 8, 32>}, {transform_indices = @transform_1, window_bounds = array<i64: 2, 8, 32>}, {transform_indices = @transform_2, window_bounds = array<i64: 2, 8, 32>}, {transform_indices = @transform_3, window_bounds = array<i64: 2, 8, 8>}, {transform_indices = @transform_4, window_bounds = array<i64: 2, 8, 8>}, {transform_indices = @transform_5, window_bounds = array<i64: 2, 8, 32>}, {transform_indices = @transform_6, window_bounds = array<i64: 2, 8, 8>}]} {
    %c0 = arith.constant 0 : index
    %c0_0 = arith.constant 0 : index
    %c0_1 = arith.constant 0 : index
    %0 = vector.load %arg2[%c0, %c0_0, %c0_1] : memref<2x8x32xf32, #tpu.memory_space<vmem>>, vector<2x8x32xf32>
    %c0_2 = arith.constant 0 : index
    %c0_3 = arith.constant 0 : index
    %c0_4 = arith.constant 0 : index
    %1 = vector.load %arg3[%c0_2, %c0_3, %c0_4] : memref<2x8x32xf32, #tpu.memory_space<vmem>>, vector<2x8x32xf32>
    %c0_5 = arith.constant 0 : index
    %c0_6 = arith.constant 0 : index
    %c0_7 = arith.constant 0 : index
    %2 = vector.load %arg4[%c0_5, %c0_6, %c0_7] : memref<2x8x32xf32, #tpu.memory_space<vmem>>, vector<2x8x32xf32>
    %cst = arith.constant 0.176776692 : f32
    %3 = vector.broadcast %cst : f32 to vector<2x8x32xf32>
    %4 = arith.mulf %0, %3 : vector<2x8x32xf32>
    %cst_8 = arith.constant dense<0.000000e+00> : vector<2x8x8xf32>
    %5 = tpu.matmul %4, %1, %cst_8 {dimension_numbers = #tpu.dot_dimension_numbers<[2], [2], [1], [1], [0, 0, 0, 1, 1, 1], [0], [0]>} : vector<2x8x32xf32>, vector<2x8x32xf32>, vector<2x8x8xf32> -> vector<2x8x8xf32>
    %c0_9 = arith.constant 0 : index
    %c0_10 = arith.constant 0 : index
    %c0_11 = arith.constant 0 : index
    %6 = vector.load %arg5[%c0_9, %c0_10, %c0_11] : memref<2x8x8xf32, #tpu.memory_space<vmem>>, vector<2x8x8xf32>
    %cst_12 = arith.constant 0.000000e+00 : f32
    %7 = vector.broadcast %cst_12 : f32 to vector<2x8x8xf32>
    %8 = arith.cmpf oeq, %6, %7 : vector<2x8x8xf32>
    %cst_13 = arith.constant -1.000000e+09 : f32
    %9 = vector.broadcast %cst_13 : f32 to vector<2x8x8xf32>
    %10 = arith.select %8, %9, %5 : vector<2x8x8xi1>, vector<2x8x8xf32>
    %cst_14 = arith.constant dense<0xFF800000> : vector<2x8xf32>
    %11 = vector.multi_reduction <maximumf>, %10, %cst_14 [2] : vector<2x8x8xf32> to vector<2x8xf32>
    %12 = vector.shape_cast %11 : vector<2x8xf32> to vector<2x8x1xf32>
    %13 = vector.broadcast %12 : vector<2x8x1xf32> to vector<2x8x8xf32>
    %14 = arith.subf %10, %13 : vector<2x8x8xf32>
    %15 = math.exp %14 : vector<2x8x8xf32>
    %cst_15 = arith.constant dense<0.000000e+00> : vector<2x8xf32>
    %16 = vector.multi_reduction <add>, %15, %cst_15 [2] : vector<2x8x8xf32> to vector<2x8xf32>
    %17 = vector.shape_cast %16 : vector<2x8xf32> to vector<2x8x1xf32>
    %18 = tpu.reciprocal %17 {approx = true} : vector<2x8x1xf32> -> vector<2x8x1xf32>
    %19 = vector.broadcast %18 : vector<2x8x1xf32> to vector<2x8x8xf32>
    %20 = arith.mulf %15, %19 : vector<2x8x8xf32>
    %c0_16 = arith.constant 0 : index
    %c0_17 = arith.constant 0 : index
    %c0_18 = arith.constant 0 : index
    %21 = vector.load %arg6[%c0_16, %c0_17, %c0_18] : memref<2x8x8xf32, #tpu.memory_space<vmem>>, vector<2x8x8xf32>
    %22 = tpu.transpose %21, [0, 2, 1] : vector<2x8x8xf32> -> vector<2x8x8xf32>
    %23 = arith.mulf %20, %22 : vector<2x8x8xf32>
    %c0_19 = arith.constant 0 : index
    %c0_20 = arith.constant 0 : index
    %c0_21 = arith.constant 0 : index
    %24 = vector.load %arg8[%c0_19, %c0_20, %c0_21] : memref<2x8x8xf32, #tpu.memory_space<vmem>>, vector<2x8x8xf32>
    tpu.vector_store %arg8[%c0_19, %c0_20, %c0_21], %23 {strides = array<i32>} : memref<2x8x8xf32, #tpu.memory_space<vmem>>, vector<2x8x8xf32>,
    %cst_22 = arith.constant dense<0.000000e+00> : vector<2x8x32xf32>
    %25 = tpu.matmul %23, %2, %cst_22 {dimension_numbers = #tpu.dot_dimension_numbers<[2], [1], [1], [2], [0, 0, 0, 1, 1, 2], [0], [0]>} : vector<2x8x8xf32>, vector<2x8x32xf32>, vector<2x8x32xf32> -> vector<2x8x32xf32>
    %c0_23 = arith.constant 0 : index
    %c0_24 = arith.constant 0 : index
    %c0_25 = arith.constant 0 : index
    %26 = vector.load %arg7[%c0_23, %c0_24, %c0_25] : memref<2x8x32xf32, #tpu.memory_space<vmem>>, vector<2x8x32xf32>
    tpu.vector_store %arg7[%c0_23, %c0_24, %c0_25], %25 {strides = array<i32>} : memref<2x8x32xf32, #tpu.memory_space<vmem>>, vector<2x8x32xf32>,
    return
  }
  func.func @transform_0(%arg0: i32, %arg1: i32) -> (i32, i32, i32) {
    %c0_i32 = arith.constant 0 : i32
    %c0_i32_0 = arith.constant 0 : i32
    return %arg0, %arg1, %c0_i32 : i32, i32, i32
  }
  func.func @transform_1(%arg0: i32, %arg1: i32) -> (i32, i32, i32) {
    %c0_i32 = arith.constant 0 : i32
    %c0_i32_0 = arith.constant 0 : i32
    %c0_i32_1 = arith.constant 0 : i32
    return %arg0, %c0_i32, %c0_i32_0 : i32, i32, i32
  }
  func.func @transform_2(%arg0: i32, %arg1: i32) -> (i32, i32, i32) {
    %c0_i32 = arith.constant 0 : i32
    %c0_i32_0 = arith.constant 0 : i32
    %c0_i32_1 = arith.constant 0 : i32
    return %arg0, %c0_i32, %c0_i32_0 : i32, i32, i32
  }
  func.func @transform_3(%arg0: i32, %arg1: i32) -> (i32, i32, i32) {
    %c0_i32 = arith.constant 0 : i32
    %c0_i32_0 = arith.constant 0 : i32
    return %arg0, %arg1, %c0_i32 : i32, i32, i32
  }
  func.func @transform_4(%arg0: i32, %arg1: i32) -> (i32, i32, i32) {
    %c0_i32 = arith.constant 0 : i32
    %c0_i32_0 = arith.constant 0 : i32
    return %arg0, %c0_i32, %arg1 : i32, i32, i32
  }
  func.func @transform_5(%arg0: i32, %arg1: i32) -> (i32, i32, i32) {
    %c0_i32 = arith.constant 0 : i32
    %c0_i32_0 = arith.constant 0 : i32
    return %arg0, %arg1, %c0_i32 : i32, i32, i32
  }
  func.func @transform_6(%arg0: i32, %arg1: i32) -> (i32, i32, i32) {
    %c0_i32 = arith.constant 0 : i32
    %c0_i32_0 = arith.constant 0 : i32
    return %arg0, %arg1, %c0_i32 : i32, i32, i32
  }
}

</mosaic_0001>

<llo_original>
// kernel: tpu_custom_call.1
$region0: #{tpu_custom_call.1}
  #allocation0 [shape = 'u32[]', space=smem, size = 0x4, offset = 0x4, fixed_abs, tag = 'smem constant byte address 0x4 - core index']
  #allocation1 [shape = 'u32[144,128]{1,0:T(1,128)}', space=vmem, size = 0x12000, scoped, tag = 'internal scratch']
  %s0 = inlined_call_operand.hbm [shape: f32[4,8,32], index: 0, kind: input, shape index: {}]
  %s1 = inlined_call_operand.hbm [shape: f32[4,8,32], index: 1, kind: input, shape index: {}]
  %s2 = inlined_call_operand.hbm [shape: f32[4,8,32], index: 2, kind: input, shape index: {}]
  %s3 = inlined_call_operand.hbm [shape: f32[4,8,8], index: 3, kind: input, shape index: {}]
  %s4 = inlined_call_operand.hbm [shape: f32[4,8,8], index: 4, kind: input, shape index: {}]
  %s5 = inlined_call_operand.hbm [shape: f32[4,8,32], index: 5, kind: output, shape index: {0}]
  %s6 = inlined_call_operand.hbm [shape: f32[4,8,8], index: 6, kind: output, shape index: {1}]
  %7 = xla_tuple %s5, %s6
  %s8 = sld [smem:[#allocation0]]
  $region81: #{tpu_custom_call.1} parent=0
    _
  %s10 = ssub.s32 1, %s8
  %s11 = scalar_select 0, %s10, %s8
  $region1: #{tpu_custom_call.1} parent=0
    #allocation2 [shape = 'u8[16384]{0}', space=vmem, size = 0x4000, scoped, tag = 'input window, operand 0']
    #allocation3 [shape = 's32[2]{0}', space=sflag, size = 0x8, scoped, tag = 'scoped memory for tpu_custom_call.1']
    #allocation4 [shape = 's32[2]{0}', space=sflag, size = 0x8, scoped, tag = 'scoped memory for tpu_custom_call.1']
    #allocation5 [shape = 'u8[16384]{0}', space=vmem, size = 0x4000, scoped, tag = 'input window, operand 1']
    #allocation6 [shape = 's32[2]{0}', space=sflag, size = 0x8, scoped, tag = 'scoped memory for tpu_custom_call.1']
    #allocation7 [shape = 'u8[16384]{0}', space=vmem, size = 0x4000, scoped, tag = 'input window, operand 2']
    #allocation8 [shape = 'u8[16384]{0}', space=vmem, size = 0x4000, scoped, tag = 'input window, operand 3']
    #allocation9 [shape = 's32[2]{0}', space=sflag, size = 0x8, scoped, tag = 'scoped memory for tpu_custom_call.1']
    #allocation10 [shape = 'u8[16384]{0}', space=vmem, size = 0x4000, scoped, tag = 'input window, operand 4']
    #allocation11 [shape = 'u8[16384]{0}', space=vmem, size = 0x4000, scoped, tag = 'output window, operand 0']
    #allocation12 [shape = 'u8[16384]{0}', space=vmem, size = 0x4000, scoped, tag = 'output window, operand 1']
    #allocation13 [shape = 's32[2]{0}', space=sflag, size = 0x8, scoped, tag = 'scoped memory for tpu_custom_call.1']
    %12 = vsyncpa [#allocation3], 0
    %s13 = scalar_lea.sflag [#allocation3], 1
    %14 = vsyncpa %s13, 0
    %15 = vsyncpa [#allocation6], 0
    %s16 = scalar_lea.sflag [#allocation6], 1
    %17 = vsyncpa %s16, 0
    %18 = vsyncpa [#allocation9], 0
    %s19 = scalar_lea.sflag [#allocation9], 1
    %20 = vsyncpa %s19, 0
    %21 = vsyncpa [#allocation4], 0
    %s22 = scalar_lea.sflag [#allocation4], 1
    %23 = vsyncpa %s22, 0
    %24 = vsyncpa [#allocation13], 0
    %s25 = scalar_lea.sflag [#allocation13], 1
    %26 = vsyncpa %s25, 0
    loop: start=0, step=1, limit=4
    $region2: #{tpu_custom_call.1} parent=1 // loop_pre_header
      _
    $region3: #{tpu_custom_call.1} parent=1 // loop_header
      %s28 = sphi 0, %s32
      %p29 = scmp.ge.s32.totalorder %s28, 4
      %s35 = sphi 0, %s47
      %s36 = sphi 0, %s43
      %s37 = sphi 0, %s35
      %s38 = sphi 0, %s36
      %s39 = sphi 0, %s37
      %s40 = sphi 0, %s38
      %s52 = sphi 0, %s54
      %s55 = sphi 0, %s52
      %s56 = sphi 0, %s55
      %s72 = sphi 0, %s56
      %s78 = sphi 0, %s80
      %s81 = sphi 0, %s78
      %s82 = sphi 0, %s81
      %s98 = sphi 0, %s82
      %s104 = sphi 0, %s106
      %s107 = sphi 0, %s104
      %s108 = sphi 0, %s107
      %s124 = sphi 0, %s108
      %s132 = sphi 0, %s134
      %s135 = sphi 0, %s132
      %s136 = sphi 0, %s135
      %s152 = sphi 0, %s136
      %s160 = sphi 0, %s162
      %s163 = sphi 0, %s160
      %s164 = sphi 0, %s163
      %s180 = sphi 0, %s164
      %s188 = sphi 0, %s190
      %s191 = sphi 0, %s188
      %s192 = sphi 0, %s191
      %s208 = sphi 0, %s192
      %s216 = sphi 0, %s218
      %s219 = sphi 0, %s216
      %s220 = sphi 0, %s219
      %s236 = sphi 0, %s220
    $region4: #{tpu_custom_call.1} parent=1 // loop_header_branch
      %31 = sbr.rel (%p29) target = $region8
    $region5: #{tpu_custom_call.1} parent=1 // loop_body
      %s33 = ssub.s32 %s28, 1
      %s34 = ssub.s32 %s28, 2
      %s41 = sadd.s32 1, %s36
      %p42 = scmp.ge.s32.totalorder %s41, 1
      %s43 = scalar_select %p42, 0, %s41
      %s44 = sadd.s32 1, %s35
      %s45 = scalar_select %p42, %s44, %s35
      %p46 = scmp.ge.s32.totalorder %s45, 2
      %s47 = scalar_select %p46, 0, %s45
      %s48 = ssub.s32 %s35, %s47
      %s49 = ssub.s32 %s36, %s43
      %s50 = sor.u32 %s48, %s49
      %p51 = scmp.eq.s32.totalorder %s50, 0
      %s53 = sadd.s32 %s52, 1
      %s54 = scalar_select %p51, %s52, %s53
      %p57 = pneg %p51
      %p58 = scmp.eq.s32.totalorder %s28, 1
      %p59 = por %p57, %p58
      %p60 = scmp.ne.s32.totalorder %s52, %s55
      %p61 = scmp.eq.s32.totalorder %s28, 0
      %p62 = por %p60, %p61
      %p63 = scmp.ne.s32.totalorder %s52, %s55
      %p64 = scmp.eq.s32.totalorder %s33, 1
      %p65 = por %p63, %p64
      %p66 = scmp.ne.s32.totalorder %s55, %s56
      %p67 = scmp.eq.s32.totalorder %s33, 0
      %p68 = por %p66, %p67
      %p69 = scmp.ne.s32.totalorder %s55, %s56
      %p70 = scmp.eq.s32.totalorder %s34, 1
      %p71 = por %p69, %p70
      %p73 = scmp.ne.s32.totalorder %s56, %s72
      %p74 = scmp.eq.s32.totalorder %s34, 0
      %p75 = por %p73, %p74
      %s76 = ssub.s32 %s35, %s47
      %p77 = scmp.eq.s32.totalorder %s76, 0
      %s79 = sadd.s32 %s78, 1
      %s80 = scalar_select %p77, %s78, %s79
      %p83 = pneg %p77
      %p84 = scmp.eq.s32.totalorder %s28, 1
      %p85 = por %p83, %p84
      %p86 = scmp.ne.s32.totalorder %s78, %s81
      %p87 = scmp.eq.s32.totalorder %s28, 0
      %p88 = por %p86, %p87
      %p89 = scmp.ne.s32.totalorder %s78, %s81
      %p90 = scmp.eq.s32.totalorder %s33, 1
      %p91 = por %p89, %p90
      %p92 = scmp.ne.s32.totalorder %s81, %s82
      %p93 = scmp.eq.s32.totalorder %s33, 0
      %p94 = por %p92, %p93
      %p95 = scmp.ne.s32.totalorder %s81, %s82
      %p96 = scmp.eq.s32.totalorder %s34, 1
      %p97 = por %p95, %p96
      %p99 = scmp.ne.s32.totalorder %s82, %s98
      %p100 = scmp.eq.s32.totalorder %s34, 0
      %p101 = por %p99, %p100
      %s102 = ssub.s32 %s35, %s47
      %p103 = scmp.eq.s32.totalorder %s102, 0
      %s105 = sadd.s32 %s104, 1
      %s106 = scalar_select %p103, %s104, %s105
      %p109 = pneg %p103
      %p110 = scmp.eq.s32.totalorder %s28, 1
      %p111 = por %p109, %p110
      %p112 = scmp.ne.s32.totalorder %s104, %s107
      %p113 = scmp.eq.s32.totalorder %s28, 0
      %p114 = por %p112, %p113
      %p115 = scmp.ne.s32.totalorder %s104, %s107
      %p116 = scmp.eq.s32.totalorder %s33, 1
      %p117 = por %p115, %p116
      %p118 = scmp.ne.s32.totalorder %s107, %s108
      %p119 = scmp.eq.s32.totalorder %s33, 0
      %p120 = por %p118, %p119
      %p121 = scmp.ne.s32.totalorder %s107, %s108
      %p122 = scmp.eq.s32.totalorder %s34, 1
      %p123 = por %p121, %p122
      %p125 = scmp.ne.s32.totalorder %s108, %s124
      %p126 = scmp.eq.s32.totalorder %s34, 0
      %p127 = por %p125, %p126
      %s128 = ssub.s32 %s35, %s47
      %s129 = ssub.s32 %s36, %s43
      %s130 = sor.u32 %s128, %s129
      %p131 = scmp.eq.s32.totalorder %s130, 0
      %s133 = sadd.s32 %s132, 1
      %s134 = scalar_select %p131, %s132, %s133
      %p137 = pneg %p131
      %p138 = scmp.eq.s32.totalorder %s28, 1
      %p139 = por %p137, %p138
      %p140 = scmp.ne.s32.totalorder %s132, %s135
      %p141 = scmp.eq.s32.totalorder %s28, 0
      %p142 = por %p140, %p141
      %p143 = scmp.ne.s32.totalorder %s132, %s135
      %p144 = scmp.eq.s32.totalorder %s33, 1
      %p145 = por %p143, %p144
      %p146 = scmp.ne.s32.totalorder %s135, %s136
      %p147 = scmp.eq.s32.totalorder %s33, 0
      %p148 = por %p146, %p147
      %p149 = scmp.ne.s32.totalorder %s135, %s136
      %p150 = scmp.eq.s32.totalorder %s34, 1
      %p151 = por %p149, %p150
      %p153 = scmp.ne.s32.totalorder %s136, %s152
      %p154 = scmp.eq.s32.totalorder %s34, 0
      %p155 = por %p153, %p154
      %s156 = ssub.s32 %s35, %s47
      %s157 = ssub.s32 %s36, %s43
      %s158 = sor.u32 %s156, %s157
      %p159 = scmp.eq.s32.totalorder %s158, 0
      %s161 = sadd.s32 %s160, 1
      %s162 = scalar_select %p159, %s160, %s161
      %p165 = pneg %p159
      %p166 = scmp.eq.s32.totalorder %s28, 1
      %p167 = por %p165, %p166
      %p168 = scmp.ne.s32.totalorder %s160, %s163
      %p169 = scmp.eq.s32.totalorder %s28, 0
      %p170 = por %p168, %p169
      %p171 = scmp.ne.s32.totalorder %s160, %s163
      %p172 = scmp.eq.s32.totalorder %s33, 1
      %p173 = por %p171, %p172
      %p174 = scmp.ne.s32.totalorder %s163, %s164
      %p175 = scmp.eq.s32.totalorder %s33, 0
      %p176 = por %p174, %p175
      %p177 = scmp.ne.s32.totalorder %s163, %s164
      %p178 = scmp.eq.s32.totalorder %s34, 1
      %p179 = por %p177, %p178
      %p181 = scmp.ne.s32.totalorder %s164, %s180
      %p182 = scmp.eq.s32.totalorder %s34, 0
      %p183 = por %p181, %p182
      %s184 = ssub.s32 %s35, %s47
      %s185 = ssub.s32 %s36, %s43
      %s186 = sor.u32 %s184, %s185
      %p187 = scmp.eq.s32.totalorder %s186, 0
      %s189 = sadd.s32 %s188, 1
      %s190 = scalar_select %p187, %s188, %s189
      %p193 = pneg %p187
      %p194 = scmp.eq.s32.totalorder %s28, 1
      %p195 = por %p193, %p194
      %p196 = scmp.ne.s32.totalorder %s188, %s191
      %p197 = scmp.eq.s32.totalorder %s28, 0
      %p198 = por %p196, %p197
      %p199 = scmp.ne.s32.totalorder %s188, %s191
      %p200 = scmp.eq.s32.totalorder %s33, 1
      %p201 = por %p199, %p200
      %p202 = scmp.ne.s32.totalorder %s191, %s192
      %p203 = scmp.eq.s32.totalorder %s33, 0
      %p204 = por %p202, %p203
      %p205 = scmp.ne.s32.totalorder %s191, %s192
      %p206 = scmp.eq.s32.totalorder %s34, 1
      %p207 = por %p205, %p206
      %p209 = scmp.ne.s32.totalorder %s192, %s208
      %p210 = scmp.eq.s32.totalorder %s34, 0
      %p211 = por %p209, %p210
      %s212 = ssub.s32 %s35, %s47
      %s213 = ssub.s32 %s36, %s43
      %s214 = sor.u32 %s212, %s213
      %p215 = scmp.eq.s32.totalorder %s214, 0
      %s217 = sadd.s32 %s216, 1
      %s218 = scalar_select %p215, %s216, %s217
      %p221 = pneg %p215
      %p222 = scmp.eq.s32.totalorder %s28, 1
      %p223 = por %p221, %p222
      %p224 = scmp.ne.s32.totalorder %s216, %s219
      %p225 = scmp.eq.s32.totalorder %s28, 0
      %p226 = por %p224, %p225
      %p227 = scmp.ne.s32.totalorder %s216, %s219
      %p228 = scmp.eq.s32.totalorder %s33, 1
      %p229 = por %p227, %p228
      %p230 = scmp.ne.s32.totalorder %s219, %s220
      %p231 = scmp.eq.s32.totalorder %s33, 0
      %p232 = por %p230, %p231
      %p233 = scmp.ne.s32.totalorder %s219, %s220
      %p234 = scmp.eq.s32.totalorder %s34, 1
      %p235 = por %p233, %p234
      %p237 = scmp.ne.s32.totalorder %s220, %s236
      %p238 = scmp.eq.s32.totalorder %s34, 0
      %p239 = por %p237, %p238
      %p240 = scmp.le.s32.totalorder 1, %s28
      %p241 = scmp.lt.s32.totalorder %s28, 3
      %p242 = pnand %p240, %p241
      %p243 = pneg %p242
      // Predicated region
      $region9: #{tpu_custom_call.1} parent=5 // pred_check
        _
      $region10: #{tpu_custom_call.1} parent=5 // pred_check_branch
        %245 = sbr.rel (%p242) target = $region12
      $region11: #{tpu_custom_call.1} parent=5 // pred_region
        %s246 = ssub.s32 %s28, 1
      $region12: #{tpu_custom_call.1} parent=5 // pred_fallthru
        _
      %p247 = scmp.lt.s32.totalorder %s28, 2
      // Predicated region
      $region13: #{tpu_custom_call.1} parent=5 // pred_check
        %p248 = pneg %p247
      $region14: #{tpu_custom_call.1} parent=5 // pred_check_branch
        %250 = sbr.rel (%p248) target = $region16
      $region15: #{tpu_custom_call.1} parent=5 // pred_region
        // Predicated region
        $region17: #{tpu_custom_call.1} parent=15 // pred_check
          %p251 = pneg %p62
        $region18: #{tpu_custom_call.1} parent=15 // pred_check_branch
          %253 = sbr.rel (%p251) target = $region20
        $region19: #{tpu_custom_call.1} parent=15 // pred_region
          %s254 = sand.u32 %s52, 1
          %s255 = scalar_lea.sflag [#allocation3], %s254
          %s256 = sand.u32 %s52, 1
          %s257 = smul.addr %s256, 16
          %s258 = scalar_lea.vmem [#allocation2], %s257
          %s259 = smul.u32 2, %s35
          %s261 = ssub.s32 256, 256
          %262 = vsyncadd %s255, %s261
          %s263 = sadd.s32 %s36, %s259
          %s264 = smul.addr %s263, 128
          %s265 = scalar_lea.hbm %s0, %s264
          %s266 = sshll.u32 %s258, 4
          %s267 = int_to_ptr.vmem [resolvable:$true] %s266
          %272 = dma.hbm_to_vmem [thread:$0]  %s265, 256, %s267, %s255, 128, 128, 8
        $region20: #{tpu_custom_call.1} parent=15 // pred_fallthru
          _
        // Predicated region
        $region21: #{tpu_custom_call.1} parent=15 // pred_check
          %p273 = pneg %p88
        $region22: #{tpu_custom_call.1} parent=15 // pred_check_branch
          %275 = sbr.rel (%p273) target = $region24
        $region23: #{tpu_custom_call.1} parent=15 // pred_region
          %s276 = sand.u32 %s28, 1
          %s277 = scalar_lea.sflag [#allocation6], %s276
          %s278 = sand.u32 %s78, 1
          %s279 = smul.addr %s278, 16
          %s280 = scalar_lea.vmem [#allocation5], %s279
          %s281 = smul.u32 2, %s35
          %s283 = ssub.s32 256, 256
          %284 = vsyncadd %s277, %s283
          %s285 = smul.addr %s281, 128
          %s286 = scalar_lea.hbm %s1, %s285
          %s287 = sshll.u32 %s280, 4
          %s288 = int_to_ptr.vmem [resolvable:$true] %s287
          %293 = dma.hbm_to_vmem [thread:$0]  %s286, 256, %s288, %s277, 128, 128, 8
        $region24: #{tpu_custom_call.1} parent=15 // pred_fallthru
          _
        // Predicated region
        $region25: #{tpu_custom_call.1} parent=15 // pred_check
          %p294 = pneg %p114
        $region26: #{tpu_custom_call.1} parent=15 // pred_check_branch
          %296 = sbr.rel (%p294) target = $region28
        $region27: #{tpu_custom_call.1} parent=15 // pred_region
          %s297 = sand.u32 %s28, 1
          %s298 = scalar_lea.sflag [#allocation6], %s297
          %s299 = sand.u32 %s104, 1
          %s300 = smul.addr %s299, 16
          %s301 = scalar_lea.vmem [#allocation7], %s300
          %s302 = smul.u32 2, %s35
          %s304 = ssub.s32 256, 256
          %305 = vsyncadd %s298, %s304
          %s306 = smul.addr %s302, 128
          %s307 = scalar_lea.hbm %s2, %s306
          %s308 = sshll.u32 %s301, 4
          %s309 = int_to_ptr.vmem [resolvable:$true] %s308
          %314 = dma.hbm_to_vmem [thread:$0]  %s307, 256, %s309, %s298, 128, 128, 8
        $region28: #{tpu_custom_call.1} parent=15 // pred_fallthru
          _
        // Predicated region
        $region29: #{tpu_custom_call.1} parent=15 // pred_check
          %p315 = pneg %p142
        $region30: #{tpu_custom_call.1} parent=15 // pred_check_branch
          %317 = sbr.rel (%p315) target = $region32
        $region31: #{tpu_custom_call.1} parent=15 // pred_region
          %s318 = sand.u32 %s28, 1
          %s319 = scalar_lea.sflag [#allocation9], %s318
          %s320 = sand.u32 %s132, 1
          %s321 = smul.addr %s320, 16
          %s322 = scalar_lea.vmem [#allocation8], %s321
          %s323 = smul.u32 2, %s35
          %s325 = ssub.s32 256, 256
          %326 = vsyncadd %s319, %s325
          %s327 = sadd.s32 %s36, %s323
          %s328 = smul.addr %s327, 128
          %s329 = scalar_lea.hbm %s3, %s328
          %s330 = sshll.u32 %s322, 4
          %s331 = int_to_ptr.vmem [resolvable:$true] %s330
          %336 = dma.hbm_to_vmem [thread:$0]  %s329, 256, %s331, %s319, 128, 128, 8
        $region32: #{tpu_custom_call.1} parent=15 // pred_fallthru
          _
        // Predicated region
        $region33: #{tpu_custom_call.1} parent=15 // pred_check
          %p337 = pneg %p170
        $region34: #{tpu_custom_call.1} parent=15 // pred_check_branch
          %339 = sbr.rel (%p337) target = $region36
        $region35: #{tpu_custom_call.1} parent=15 // pred_region
          %s340 = sand.u32 %s28, 1
          %s341 = scalar_lea.sflag [#allocation9], %s340
          %s342 = sand.u32 %s160, 1
          %s343 = smul.addr %s342, 16
          %s344 = scalar_lea.vmem [#allocation10], %s343
          %s345 = smul.u32 2, %s35
          %s347 = ssub.s32 256, 256
          %348 = vsyncadd %s341, %s347
          %s349 = sadd.s32 %s36, %s345
          %s350 = smul.addr %s349, 128
          %s351 = scalar_lea.hbm %s4, %s350
          %s352 = sshll.u32 %s344, 4
          %s353 = int_to_ptr.vmem [resolvable:$true] %s352
          %358 = dma.hbm_to_vmem [thread:$0]  %s351, 256, %s353, %s341, 128, 128, 8
        $region36: #{tpu_custom_call.1} parent=15 // pred_fallthru
          _
      $region16: #{tpu_custom_call.1} parent=5 // pred_fallthru
        _
      %p359 = scmp.le.s32.totalorder 1, %s28
      %p360 = scmp.lt.s32.totalorder %s28, 3
      %p361 = pnand %p359, %p360
      %p362 = pneg %p361
      // Predicated region
      $region37: #{tpu_custom_call.1} parent=5 // pred_check
        _
      $region38: #{tpu_custom_call.1} parent=5 // pred_check_branch
        %364 = sbr.rel (%p361) target = $region40
      $region39: #{tpu_custom_call.1} parent=5 // pred_region
        %s365 = ssub.s32 %s28, 1
        %s366 = sand.u32 %s55, 1
        %s367 = scalar_lea.sflag [#allocation3], %s366
        %s368 = sand.u32 %s55, 1
        %s369 = smul.addr %s368, 16
        %s370 = scalar_lea.vmem [#allocation2], %s369
        // Predicated region
        $region41: #{tpu_custom_call.1} parent=39 // pred_check
          %p371 = pneg %p68
        $region42: #{tpu_custom_call.1} parent=39 // pred_check_branch
          %373 = sbr.rel (%p371) target = $region44
        $region43: #{tpu_custom_call.1} parent=39 // pred_region
          %374 = dma.done %s367, 256
        $region44: #{tpu_custom_call.1} parent=39 // pred_fallthru
          _
        %s375 = sand.u32 %s33, 1
        %s376 = scalar_lea.sflag [#allocation6], %s375
        %s377 = sand.u32 %s81, 1
        %s378 = smul.addr %s377, 16
        %s379 = scalar_lea.vmem [#allocation5], %s378
        // Predicated region
        $region45: #{tpu_custom_call.1} parent=39 // pred_check
          %p380 = pneg %p94
        $region46: #{tpu_custom_call.1} parent=39 // pred_check_branch
          %382 = sbr.rel (%p380) target = $region48
        $region47: #{tpu_custom_call.1} parent=39 // pred_region
          %383 = dma.done %s376, 256
        $region48: #{tpu_custom_call.1} parent=39 // pred_fallthru
          _
        %s384 = sand.u32 %s33, 1
        %s385 = scalar_lea.sflag [#allocation6], %s384
        %s386 = sand.u32 %s107, 1
        %s387 = smul.addr %s386, 16
        %s388 = scalar_lea.vmem [#allocation7], %s387
        // Predicated region
        $region49: #{tpu_custom_call.1} parent=39 // pred_check
          %p389 = pneg %p120
        $region50: #{tpu_custom_call.1} parent=39 // pred_check_branch
          %391 = sbr.rel (%p389) target = $region52
        $region51: #{tpu_custom_call.1} parent=39 // pred_region
          %392 = dma.done %s385, 256
        $region52: #{tpu_custom_call.1} parent=39 // pred_fallthru
          _
        %s393 = sand.u32 %s33, 1
        %s394 = scalar_lea.sflag [#allocation9], %s393
        %s395 = sand.u32 %s135, 1
        %s396 = smul.addr %s395, 16
        %s397 = scalar_lea.vmem [#allocation8], %s396
        // Predicated region
        $region53: #{tpu_custom_call.1} parent=39 // pred_check
          %p398 = pneg %p148
        $region54: #{tpu_custom_call.1} parent=39 // pred_check_branch
          %400 = sbr.rel (%p398) target = $region56
        $region55: #{tpu_custom_call.1} parent=39 // pred_region
          %401 = dma.done %s394, 256
        $region56: #{tpu_custom_call.1} parent=39 // pred_fallthru
          _
        %s402 = sand.u32 %s33, 1
        %s403 = scalar_lea.sflag [#allocation9], %s402
        %s404 = sand.u32 %s163, 1
        %s405 = smul.addr %s404, 16
        %s406 = scalar_lea.vmem [#allocation10], %s405
        // Predicated region
        $region57: #{tpu_custom_call.1} parent=39 // pred_check
          %p407 = pneg %p176
        $region58: #{tpu_custom_call.1} parent=39 // pred_check_branch
          %409 = sbr.rel (%p407) target = $region60
        $region59: #{tpu_custom_call.1} parent=39 // pred_region
          %410 = dma.done %s403, 256
        $region60: #{tpu_custom_call.1} parent=39 // pred_fallthru
          _
        %s411 = sand.u32 %s55, 1
        %s412 = scalar_lea.sflag [#allocation3], %s411
        %s413 = sand.u32 %s55, 1
        %s414 = smul.addr %s413, 16
        %s415 = scalar_lea.vmem [#allocation2], %s414
        %p416 = pneg %p68
        %p417 = pneg %p65
        %s418 = sand.u32 %s33, 1
        %s419 = scalar_lea.sflag [#allocation6], %s418
        %s420 = sand.u32 %s81, 1
        %s421 = smul.addr %s420, 16
        %s422 = scalar_lea.vmem [#allocation5], %s421
        %p423 = pneg %p94
        %p424 = pneg %p91
        %s425 = sand.u32 %s33, 1
        %s426 = scalar_lea.sflag [#allocation6], %s425
        %s427 = sand.u32 %s107, 1
        %s428 = smul.addr %s427, 16
        %s429 = scalar_lea.vmem [#allocation7], %s428
        %p430 = pneg %p120
        %p431 = pneg %p117
        %s432 = sand.u32 %s33, 1
        %s433 = scalar_lea.sflag [#allocation9], %s432
        %s434 = sand.u32 %s135, 1
        %s435 = smul.addr %s434, 16
        %s436 = scalar_lea.vmem [#allocation8], %s435
        %p437 = pneg %p148
        %p438 = pneg %p145
        %s439 = sand.u32 %s33, 1
        %s440 = scalar_lea.sflag [#allocation9], %s439
        %s441 = sand.u32 %s163, 1
        %s442 = smul.addr %s441, 16
        %s443 = scalar_lea.vmem [#allocation10], %s442
        %p444 = pneg %p176
        %p445 = pneg %p173
        %p446 = pneg %p204
        %p447 = pneg %p201
        %s448 = sand.u32 %s191, 1
        %s449 = scalar_lea.sflag [#allocation4], %s448
        %s450 = sand.u32 %s191, 1
        %s451 = smul.addr %s450, 16
        %s452 = scalar_lea.vmem [#allocation11], %s451
        %p453 = pneg %p232
        %p454 = pneg %p229
        %s455 = sand.u32 %s219, 1
        %s456 = scalar_lea.sflag [#allocation13], %s455
        %s457 = sand.u32 %s219, 1
        %s458 = smul.addr %s457, 16
        %s459 = scalar_lea.vmem [#allocation12], %s458
        %s460 = smul.u32 2, %s37
        %s461 = smul.u32 2, %s37
        %s462 = smul.u32 2, %s37
        %s463 = smul.u32 2, %s37
        %s464 = smul.u32 2, %s37
        %s465 = smul.u32 2, %s37
        %s466 = smul.u32 2, %s37
        %v467 = vld [vmem:[%s370] sm:$0xff]
        %v468 = vld [vmem:[%s370 + $0x8] sm:$0xff]
        %v469 = vld [vmem:[%s379] sm:$0xff]
        %v470 = vld [vmem:[%s379 + $0x8] sm:$0xff]
        %v471 = vld [vmem:[%s388] sm:$0xff]
        %v472 = vld [vmem:[%s388 + $0x8] sm:$0xff]
        %v473 = vmul.f32 %v467, 0.17677669
        %v474 = vmul.f32 %v468, 0.17677669
        %vm475 = vcmask 261120
        %v477 = vsel %vm475, %v473, 0
        %v480 = vsel %vm475, %v469, 0
        %482 = vmatprep.subr.mxu0 0.0
        %483 = vmatpush1.xpose.msra.mxu0 %v480
        %484 = vmatprep.subr.mxu0 0.0
        %485 = vmatpush1.xpose.msra.mxu0 0.0
        %486 = vmatprep.subr.mxu0 0.0
        %487 = vmatpush1.xpose.msra.mxu0 0.0
        %488 = vmatprep.subr.mxu0 0.0
        %489 = vmatpush1.xpose.msra.mxu0 0.0
        %490 = vmatprep.subr.mxu0 0.0
        %491 = vmatpush1.xpose.msra.mxu0 0.0
        %492 = vmatprep.subr.mxu0 0.0
        %493 = vmatpush1.xpose.msra.mxu0 0.0
        %494 = vmatprep.subr.mxu0 0.0
        %495 = vmatpush1.xpose.msra.mxu0 0.0
        %496 = vmatprep.subr.mxu0 0.0
        %497 = vmatpush1.xpose.msra.mxu0 0.0
        %498 = vmatprep.subr.mxu0 0.0
        %499 = vmatpush1.xpose.msra.mxu0 0.0
        %500 = vmatprep.subr.mxu0 0.0
        %501 = vmatpush1.xpose.msra.mxu0 0.0
        %502 = vmatprep.subr.mxu0 0.0
        %503 = vmatpush1.xpose.msra.mxu0 0.0
        %504 = vmatprep.subr.mxu0 0.0
        %505 = vmatpush1.xpose.msra.mxu0 0.0
        %506 = vmatprep.subr.mxu0 0.0
        %507 = vmatpush1.xpose.msra.mxu0 0.0
        %508 = vmatprep.subr.mxu0 0.0
        %509 = vmatpush1.xpose.msra.mxu0 0.0
        %510 = vmatprep.subr.mxu0 0.0
        %511 = vmatpush1.xpose.msra.mxu0 0.0
        %512 = vmatprep.subr.mxu0 0.0
        %513 = vmatpush1.xpose.msra.mxu0 0.0
        %514 = vmatprep.subr.mxu0 0.0
        %515 = vmatpush1.xpose.msra.mxu0 0.0
        %516 = vmatprep.subr.mxu0 0.0
        %517 = vmatpush1.xpose.msra.mxu0 0.0
        %518 = vmatprep.subr.mxu0 0.0
        %519 = vmatpush1.xpose.msra.mxu0 0.0
        %520 = vmatprep.subr.mxu0 0.0
        %521 = vmatpush1.xpose.msra.mxu0 0.0
        %522 = vmatprep.subr.mxu0 0.0
        %523 = vmatpush1.xpose.msra.mxu0 0.0
        %524 = vmatprep.subr.mxu0 0.0
        %525 = vmatpush1.xpose.msra.mxu0 0.0
        %526 = vmatprep.subr.mxu0 0.0
        %527 = vmatpush1.xpose.msra.mxu0 0.0
        %528 = vmatprep.subr.mxu0 0.0
        %529 = vmatpush1.xpose.msra.mxu0 0.0
        %530 = vmatprep.subr.mxu0 0.0
        %531 = vmatpush1.xpose.msra.mxu0 0.0
        %532 = vmatprep.subr.mxu0 0.0
        %533 = vmatpush1.xpose.msra.mxu0 0.0
        %534 = vmatprep.subr.mxu0 0.0
        %535 = vmatpush1.xpose.msra.mxu0 0.0
        %536 = vmatprep.subr.mxu0 0.0
        %537 = vmatpush1.xpose.msra.mxu0 0.0
        %538 = vmatprep.subr.mxu0 0.0
        %539 = vmatpush1.xpose.msra.mxu0 0.0
        %540 = vmatprep.subr.mxu0 0.0
        %541 = vmatpush1.xpose.msra.mxu0 0.0
        %542 = vmatprep.subr.mxu0 0.0
        %543 = vmatpush1.xpose.msra.mxu0 0.0
        %544 = vmatprep.subr.mxu0 0.0
        %545 = vmatpush1.xpose.msra.mxu0 0.0
        %546 = vmatprep.mubr.f32.mxu0 0.0
        %547 = vmatmul.mubr.f32.gmra.mrb[0].mxu0 %v477
        %v548 = vpop.f32.mrb[0].mxu0
        %v549 = vadd.f32 0.0, %v548
        %v550 = vpop.f32.mrb[0].mxu0
        %551 = vdwg.mxu0
        %v553 = vsel %vm475, %v474, 0
        %v556 = vsel %vm475, %v470, 0
        %558 = vmatprep.subr.mxu0 0.0
        %559 = vmatpush1.xpose.msra.mxu0 %v556
        %560 = vmatprep.subr.mxu0 0.0
        %561 = vmatpush1.xpose.msra.mxu0 0.0
        %562 = vmatprep.subr.mxu0 0.0
        %563 = vmatpush1.xpose.msra.mxu0 0.0
        %564 = vmatprep.subr.mxu0 0.0
        %565 = vmatpush1.xpose.msra.mxu0 0.0
        %566 = vmatprep.subr.mxu0 0.0
        %567 = vmatpush1.xpose.msra.mxu0 0.0
        %568 = vmatprep.subr.mxu0 0.0
        %569 = vmatpush1.xpose.msra.mxu0 0.0
        %570 = vmatprep.subr.mxu0 0.0
        %571 = vmatpush1.xpose.msra.mxu0 0.0
        %572 = vmatprep.subr.mxu0 0.0
        %573 = vmatpush1.xpose.msra.mxu0 0.0
        %574 = vmatprep.subr.mxu0 0.0
        %575 = vmatpush1.xpose.msra.mxu0 0.0
        %576 = vmatprep.subr.mxu0 0.0
        %577 = vmatpush1.xpose.msra.mxu0 0.0
        %578 = vmatprep.subr.mxu0 0.0
        %579 = vmatpush1.xpose.msra.mxu0 0.0
        %580 = vmatprep.subr.mxu0 0.0
        %581 = vmatpush1.xpose.msra.mxu0 0.0
        %582 = vmatprep.subr.mxu0 0.0
        %583 = vmatpush1.xpose.msra.mxu0 0.0
        %584 = vmatprep.subr.mxu0 0.0
        %585 = vmatpush1.xpose.msra.mxu0 0.0
        %586 = vmatprep.subr.mxu0 0.0
        %587 = vmatpush1.xpose.msra.mxu0 0.0
        %588 = vmatprep.subr.mxu0 0.0
        %589 = vmatpush1.xpose.msra.mxu0 0.0
        %590 = vmatprep.subr.mxu0 0.0
        %591 = vmatpush1.xpose.msra.mxu0 0.0
        %592 = vmatprep.subr.mxu0 0.0
        %593 = vmatpush1.xpose.msra.mxu0 0.0
        %594 = vmatprep.subr.mxu0 0.0
        %595 = vmatpush1.xpose.msra.mxu0 0.0
        %596 = vmatprep.subr.mxu0 0.0
        %597 = vmatpush1.xpose.msra.mxu0 0.0
        %598 = vmatprep.subr.mxu0 0.0
        %599 = vmatpush1.xpose.msra.mxu0 0.0
        %600 = vmatprep.subr.mxu0 0.0
        %601 = vmatpush1.xpose.msra.mxu0 0.0
        %602 = vmatprep.subr.mxu0 0.0
        %603 = vmatpush1.xpose.msra.mxu0 0.0
        %604 = vmatprep.subr.mxu0 0.0
        %605 = vmatpush1.xpose.msra.mxu0 0.0
        %606 = vmatprep.subr.mxu0 0.0
        %607 = vmatpush1.xpose.msra.mxu0 0.0
        %608 = vmatprep.subr.mxu0 0.0
        %609 = vmatpush1.xpose.msra.mxu0 0.0
        %610 = vmatprep.subr.mxu0 0.0
        %611 = vmatpush1.xpose.msra.mxu0 0.0
        %612 = vmatprep.subr.mxu0 0.0
        %613 = vmatpush1.xpose.msra.mxu0 0.0
        %614 = vmatprep.subr.mxu0 0.0
        %615 = vmatpush1.xpose.msra.mxu0 0.0
        %616 = vmatprep.subr.mxu0 0.0
        %617 = vmatpush1.xpose.msra.mxu0 0.0
        %618 = vmatprep.subr.mxu0 0.0
        %619 = vmatpush1.xpose.msra.mxu0 0.0
        %620 = vmatprep.subr.mxu0 0.0
        %621 = vmatpush1.xpose.msra.mxu0 0.0
        %622 = vmatprep.mubr.f32.mxu0 0.0
        %623 = vmatmul.mubr.f32.gmra.mrb[0].mxu0 %v553
        %v624 = vpop.f32.mrb[0].mxu0
        %v625 = vadd.f32 0.0, %v624
        %v626 = vpop.f32.mrb[0].mxu0
        %627 = vdwg.mxu0
        %v628 = vld [vmem:[%s397] sm:$0xff]
        %v629 = vld [vmem:[%s397 + $0x8] sm:$0xff]
        %vm630 = vcmp.eq.f32.partialorder %v628, 0.0
        %vm631 = vcmp.eq.f32.partialorder %v629, 0.0
        %v632 = vsel %vm630, -1e+09, %v549
        %v633 = vsel %vm631, -1e+09, %v625
        %vm634 = vcmask 64512
        %v635 = vsel %vm634, %v632, -inf
        %636 = vmax.xlane.f32.xlu0 %v635
        %v637 = vpop.xlane.xlu0 %636
        %v638 = vsel %vm634, %v633, -inf
        %639 = vmax.xlane.f32.xlu0 %v638
        %v640 = vpop.xlane.xlu0 %639
        %v641 = vsub.f32 %v632, %v637
        %v642 = vsub.f32 %v633, %v640
        %v643 = vmul.f32 %v641, 1.442695
        %v644 = vpow.pop %v643
        %v645 = vmul.f32 %v642, 1.442695
        %v646 = vpow.pop %v645
        %v647 = vsel %vm634, %v644, 0.0
        %648 = vadd.xlane.f32.xlu0 %v647
        %v649 = vpop.xlane.xlu0 %648
        %v650 = vsel %vm634, %v646, 0.0
        %651 = vadd.xlane.f32.xlu0 %v650
        %v652 = vpop.xlane.xlu0 %651
        %v653 = vrcp.pop %v649
        %v654 = vrcp.pop %v652
        %v655 = vmul.f32 %v644, %v653
        %v656 = vmul.f32 %v646, %v654
        %v657 = vld [vmem:[%s406] sm:$0xff]
        %v658 = vld [vmem:[%s406 + $0x8] sm:$0xff]
        %659 = vxpose.xlu0.b32.start [1/16] %v657, 128
        %660 = vxpose.xlu0.b32.cont [2/16] 0.0, 128
        %661 = vxpose.xlu0.b32.cont [3/16] 0.0, 128
        %662 = vxpose.xlu0.b32.cont [4/16] 0.0, 128
        %663 = vxpose.xlu0.b32.cont [5/16] 0.0, 128
        %664 = vxpose.xlu0.b32.cont [6/16] 0.0, 128
        %665 = vxpose.xlu0.b32.cont [7/16] 0.0, 128
        %666 = vxpose.xlu0.b32.cont [8/16] 0.0, 128
        %667 = vxpose.xlu0.b32.cont [9/16] 0.0, 128
        %668 = vxpose.xlu0.b32.cont [10/16] 0.0, 128
        %669 = vxpose.xlu0.b32.cont [11/16] 0.0, 128
        %670 = vxpose.xlu0.b32.cont [12/16] 0.0, 128
        %671 = vxpose.xlu0.b32.cont [13/16] 0.0, 128
        %672 = vxpose.xlu0.b32.cont [14/16] 0.0, 128
        %673 = vxpose.xlu0.b32.cont [15/16] 0.0, 128
        %674 = vxpose.xlu0.b32.end [16/16] 0.0, 128
        %v675 = vpop.trf.xlu0
        %v676 = vpop.trf.xlu0
        %v677 = vpop.trf.xlu0
        %v678 = vpop.trf.xlu0
        %v679 = vpop.trf.xlu0
        %v680 = vpop.trf.xlu0
        %v681 = vpop.trf.xlu0
        %v682 = vpop.trf.xlu0
        %v683 = vpop.trf.xlu0
        %v684 = vpop.trf.xlu0
        %v685 = vpop.trf.xlu0
        %v686 = vpop.trf.xlu0
        %v687 = vpop.trf.xlu0
        %v688 = vpop.trf.xlu0
        %v689 = vpop.trf.xlu0
        %v690 = vpop.trf.xlu0
        %691 = vxpose.xlu0.b32.start [1/16] %v658, 128
        %692 = vxpose.xlu0.b32.cont [2/16] 0.0, 128
        %693 = vxpose.xlu0.b32.cont [3/16] 0.0, 128
        %694 = vxpose.xlu0.b32.cont [4/16] 0.0, 128
        %695 = vxpose.xlu0.b32.cont [5/16] 0.0, 128
        %696 = vxpose.xlu0.b32.cont [6/16] 0.0, 128
        %697 = vxpose.xlu0.b32.cont [7/16] 0.0, 128
        %698 = vxpose.xlu0.b32.cont [8/16] 0.0, 128
        %699 = vxpose.xlu0.b32.cont [9/16] 0.0, 128
        %700 = vxpose.xlu0.b32.cont [10/16] 0.0, 128
        %701 = vxpose.xlu0.b32.cont [11/16] 0.0, 128
        %702 = vxpose.xlu0.b32.cont [12/16] 0.0, 128
        %703 = vxpose.xlu0.b32.cont [13/16] 0.0, 128
        %704 = vxpose.xlu0.b32.cont [14/16] 0.0, 128
        %705 = vxpose.xlu0.b32.cont [15/16] 0.0, 128
        %706 = vxpose.xlu0.b32.end [16/16] 0.0, 128
        %v707 = vpop.trf.xlu0
        %v708 = vpop.trf.xlu0
        %v709 = vpop.trf.xlu0
        %v710 = vpop.trf.xlu0
        %v711 = vpop.trf.xlu0
        %v712 = vpop.trf.xlu0
        %v713 = vpop.trf.xlu0
        %v714 = vpop.trf.xlu0
        %v715 = vpop.trf.xlu0
        %v716 = vpop.trf.xlu0
        %v717 = vpop.trf.xlu0
        %v718 = vpop.trf.xlu0
        %v719 = vpop.trf.xlu0
        %v720 = vpop.trf.xlu0
        %v721 = vpop.trf.xlu0
        %v722 = vpop.trf.xlu0
        %v723 = vmul.f32 %v655, %v675
        %v724 = vmul.f32 %v656, %v707
        %725 = vst.msk [vmem:[%s459] sm:$0xff] %vm634, %v723
        %726 = vst.msk [vmem:[%s459 + $0x8] sm:$0xff] %vm634, %v724
        %v728 = vsel %vm634, %v723, 0
        %730 = vmatprep.subr.mxu0 0.0
        %731 = vmatpush1.msra.mxu0 %v471
        %732 = vmatprep.subr.mxu0 0.0
        %733 = vmatpush1.msra.mxu0 0.0
        %734 = vmatprep.subr.mxu0 0.0
        %735 = vmatpush1.msra.mxu0 0.0
        %736 = vmatprep.subr.mxu0 0.0
        %737 = vmatpush1.msra.mxu0 0.0
        %738 = vmatprep.subr.mxu0 0.0
        %739 = vmatpush1.msra.mxu0 0.0
        %740 = vmatprep.subr.mxu0 0.0
        %741 = vmatpush1.msra.mxu0 0.0
        %742 = vmatprep.subr.mxu0 0.0
        %743 = vmatpush1.msra.mxu0 0.0
        %744 = vmatprep.subr.mxu0 0.0
        %745 = vmatpush1.msra.mxu0 0.0
        %746 = vmatprep.subr.mxu0 0.0
        %747 = vmatpush1.msra.mxu0 0.0
        %748 = vmatprep.subr.mxu0 0.0
        %749 = vmatpush1.msra.mxu0 0.0
        %750 = vmatprep.subr.mxu0 0.0
        %751 = vmatpush1.msra.mxu0 0.0
        %752 = vmatprep.subr.mxu0 0.0
        %753 = vmatpush1.msra.mxu0 0.0
        %754 = vmatprep.subr.mxu0 0.0
        %755 = vmatpush1.msra.mxu0 0.0
        %756 = vmatprep.subr.mxu0 0.0
        %757 = vmatpush1.msra.mxu0 0.0
        %758 = vmatprep.subr.mxu0 0.0
        %759 = vmatpush1.msra.mxu0 0.0
        %760 = vmatprep.subr.mxu0 0.0
        %761 = vmatpush1.msra.mxu0 0.0
        %762 = vmatprep.subr.mxu0 0.0
        %763 = vmatpush1.msra.mxu0 0.0
        %764 = vmatprep.subr.mxu0 0.0
        %765 = vmatpush1.msra.mxu0 0.0
        %766 = vmatprep.subr.mxu0 0.0
        %767 = vmatpush1.msra.mxu0 0.0
        %768 = vmatprep.subr.mxu0 0.0
        %769 = vmatpush1.msra.mxu0 0.0
        %770 = vmatprep.subr.mxu0 0.0
        %771 = vmatpush1.msra.mxu0 0.0
        %772 = vmatprep.subr.mxu0 0.0
        %773 = vmatpush1.msra.mxu0 0.0
        %774 = vmatprep.subr.mxu0 0.0
        %775 = vmatpush1.msra.mxu0 0.0
        %776 = vmatprep.subr.mxu0 0.0
        %777 = vmatpush1.msra.mxu0 0.0
        %778 = vmatprep.subr.mxu0 0.0
        %779 = vmatpush1.msra.mxu0 0.0
        %780 = vmatprep.subr.mxu0 0.0
        %781 = vmatpush1.msra.mxu0 0.0
        %782 = vmatprep.subr.mxu0 0.0
        %783 = vmatpush1.msra.mxu0 0.0
        %784 = vmatprep.subr.mxu0 0.0
        %785 = vmatpush1.msra.mxu0 0.0
        %786 = vmatprep.subr.mxu0 0.0
        %787 = vmatpush1.msra.mxu0 0.0
        %788 = vmatprep.subr.mxu0 0.0
        %789 = vmatpush1.msra.mxu0 0.0
        %790 = vmatprep.subr.mxu0 0.0
        %791 = vmatpush1.msra.mxu0 0.0
        %792 = vmatprep.subr.mxu0 0.0
        %793 = vmatpush1.msra.mxu0 0.0
        %794 = vmatprep.mubr.f32.mxu0 0.0
        %795 = vmatmul.mubr.f32.gmra.mrb[0].mxu0 %v728
        %v796 = vpop.f32.mrb[0].mxu0
        %v797 = vadd.f32 0.0, %v796
        %v798 = vpop.f32.mrb[0].mxu0
        %799 = vdwg.mxu0
        %v801 = vsel %vm634, %v724, 0
        %803 = vmatprep.subr.mxu0 0.0
        %804 = vmatpush1.msra.mxu0 %v472
        %805 = vmatprep.subr.mxu0 0.0
        %806 = vmatpush1.msra.mxu0 0.0
        %807 = vmatprep.subr.mxu0 0.0
        %808 = vmatpush1.msra.mxu0 0.0
        %809 = vmatprep.subr.mxu0 0.0
        %810 = vmatpush1.msra.mxu0 0.0
        %811 = vmatprep.subr.mxu0 0.0
        %812 = vmatpush1.msra.mxu0 0.0
        %813 = vmatprep.subr.mxu0 0.0
        %814 = vmatpush1.msra.mxu0 0.0
        %815 = vmatprep.subr.mxu0 0.0
        %816 = vmatpush1.msra.mxu0 0.0
        %817 = vmatprep.subr.mxu0 0.0
        %818 = vmatpush1.msra.mxu0 0.0
        %819 = vmatprep.subr.mxu0 0.0
        %820 = vmatpush1.msra.mxu0 0.0
        %821 = vmatprep.subr.mxu0 0.0
        %822 = vmatpush1.msra.mxu0 0.0
        %823 = vmatprep.subr.mxu0 0.0
        %824 = vmatpush1.msra.mxu0 0.0
        %825 = vmatprep.subr.mxu0 0.0
        %826 = vmatpush1.msra.mxu0 0.0
        %827 = vmatprep.subr.mxu0 0.0
        %828 = vmatpush1.msra.mxu0 0.0
        %829 = vmatprep.subr.mxu0 0.0
        %830 = vmatpush1.msra.mxu0 0.0
        %831 = vmatprep.subr.mxu0 0.0
        %832 = vmatpush1.msra.mxu0 0.0
        %833 = vmatprep.subr.mxu0 0.0
        %834 = vmatpush1.msra.mxu0 0.0
        %835 = vmatprep.subr.mxu0 0.0
        %836 = vmatpush1.msra.mxu0 0.0
        %837 = vmatprep.subr.mxu0 0.0
        %838 = vmatpush1.msra.mxu0 0.0
        %839 = vmatprep.subr.mxu0 0.0
        %840 = vmatpush1.msra.mxu0 0.0
        %841 = vmatprep.subr.mxu0 0.0
        %842 = vmatpush1.msra.mxu0 0.0
        %843 = vmatprep.subr.mxu0 0.0
        %844 = vmatpush1.msra.mxu0 0.0
        %845 = vmatprep.subr.mxu0 0.0
        %846 = vmatpush1.msra.mxu0 0.0
        %847 = vmatprep.subr.mxu0 0.0
        %848 = vmatpush1.msra.mxu0 0.0
        %849 = vmatprep.subr.mxu0 0.0
        %850 = vmatpush1.msra.mxu0 0.0
        %851 = vmatprep.subr.mxu0 0.0
        %852 = vmatpush1.msra.mxu0 0.0
        %853 = vmatprep.subr.mxu0 0.0
        %854 = vmatpush1.msra.mxu0 0.0
        %855 = vmatprep.subr.mxu0 0.0
        %856 = vmatpush1.msra.mxu0 0.0
        %857 = vmatprep.subr.mxu0 0.0
        %858 = vmatpush1.msra.mxu0 0.0
        %859 = vmatprep.subr.mxu0 0.0
        %860 = vmatpush1.msra.mxu0 0.0
        %861 = vmatprep.subr.mxu0 0.0
        %862 = vmatpush1.msra.mxu0 0.0
        %863 = vmatprep.subr.mxu0 0.0
        %864 = vmatpush1.msra.mxu0 0.0
        %865 = vmatprep.subr.mxu0 0.0
        %866 = vmatpush1.msra.mxu0 0.0
        %867 = vmatprep.mubr.f32.mxu0 0.0
        %868 = vmatmul.mubr.f32.gmra.mrb[0].mxu0 %v801
        %v869 = vpop.f32.mrb[0].mxu0
        %v870 = vadd.f32 0.0, %v869
        %v871 = vpop.f32.mrb[0].mxu0
        %872 = vdwg.mxu0
        %873 = vst.msk [vmem:[%s452] sm:$0xff] %vm475, %v797
        %874 = vst.msk [vmem:[%s452 + $0x8] sm:$0xff] %vm475, %v870
        %s875 = sand.u32 %s191, 1
        %s876 = scalar_lea.sflag [#allocation4], %s875
        %s877 = sand.u32 %s191, 1
        %s878 = smul.addr %s877, 16
        %s879 = scalar_lea.vmem [#allocation11], %s878
        %s880 = sand.u32 %s219, 1
        %s881 = scalar_lea.sflag [#allocation13], %s880
        %s882 = sand.u32 %s219, 1
        %s883 = smul.addr %s882, 16
        %s884 = scalar_lea.vmem [#allocation12], %s883
        // Predicated region
        $region61: #{tpu_custom_call.1} parent=39 // pred_check
          %p885 = pneg %p201
        $region62: #{tpu_custom_call.1} parent=39 // pred_check_branch
          %887 = sbr.rel (%p885) target = $region64
        $region63: #{tpu_custom_call.1} parent=39 // pred_region
          %s888 = smul.u32 2, %s37
          %s890 = ssub.s32 256, 256
          %891 = vsyncadd %s876, %s890
          %s892 = sadd.s32 %s38, %s888
          %s893 = smul.addr %s892, 128
          %s894 = scalar_lea.hbm %s5, %s893
          %s895 = sshll.u32 %s879, 4
          %s896 = int_to_ptr.vmem [resolvable:$true] %s895
          %901 = dma.vmem_to_hbm [thread:$0]  %s896, 256, %s894, %s876, 128, 128, 8
        $region64: #{tpu_custom_call.1} parent=39 // pred_fallthru
          _
        // Predicated region
        $region65: #{tpu_custom_call.1} parent=39 // pred_check
          %p902 = pneg %p229
        $region66: #{tpu_custom_call.1} parent=39 // pred_check_branch
          %904 = sbr.rel (%p902) target = $region68
        $region67: #{tpu_custom_call.1} parent=39 // pred_region
          %s905 = smul.u32 2, %s37
          %s907 = ssub.s32 256, 256
          %908 = vsyncadd %s881, %s907
          %s909 = sadd.s32 %s38, %s905
          %s910 = smul.addr %s909, 128
          %s911 = scalar_lea.hbm %s6, %s910
          %s912 = sshll.u32 %s884, 4
          %s913 = int_to_ptr.vmem [resolvable:$true] %s912
          %918 = dma.vmem_to_hbm [thread:$0]  %s913, 256, %s911, %s881, 128, 128, 8
        $region68: #{tpu_custom_call.1} parent=39 // pred_fallthru
          _
      $region40: #{tpu_custom_call.1} parent=5 // pred_fallthru
        _
      %p919 = scmp.le.s32.totalorder 2, %s28
      // Predicated region
      $region69: #{tpu_custom_call.1} parent=5 // pred_check
        %p920 = pneg %p919
      $region70: #{tpu_custom_call.1} parent=5 // pred_check_branch
        %922 = sbr.rel (%p920) target = $region72
      $region71: #{tpu_custom_call.1} parent=5 // pred_region
        %s923 = ssub.s32 %s28, 2
        // Predicated region
        $region73: #{tpu_custom_call.1} parent=71 // pred_check
          %p924 = pneg %p207
        $region74: #{tpu_custom_call.1} parent=71 // pred_check_branch
          %926 = sbr.rel (%p924) target = $region76
        $region75: #{tpu_custom_call.1} parent=71 // pred_region
          %s927 = sand.u32 %s192, 1
          %s928 = scalar_lea.sflag [#allocation4], %s927
          %s929 = sand.u32 %s192, 1
          %s930 = smul.addr %s929, 16
          %s931 = scalar_lea.vmem [#allocation11], %s930
          %932 = dma.done %s928, 256
        $region76: #{tpu_custom_call.1} parent=71 // pred_fallthru
          _
        // Predicated region
        $region77: #{tpu_custom_call.1} parent=71 // pred_check
          %p933 = pneg %p235
        $region78: #{tpu_custom_call.1} parent=71 // pred_check_branch
          %935 = sbr.rel (%p933) target = $region80
        $region79: #{tpu_custom_call.1} parent=71 // pred_region
          %s936 = sand.u32 %s220, 1
          %s937 = scalar_lea.sflag [#allocation13], %s936
          %s938 = sand.u32 %s220, 1
          %s939 = smul.addr %s938, 16
          %s940 = scalar_lea.vmem [#allocation12], %s939
          %941 = dma.done %s937, 256
        $region80: #{tpu_custom_call.1} parent=71 // pred_fallthru
          _
      $region72: #{tpu_custom_call.1} parent=5 // pred_fallthru
        _
    $region6: #{tpu_custom_call.1} parent=1 // loop_footer
      %s32 = sadd.s32 1, %s28
    $region7: #{tpu_custom_call.1} parent=1 // loop_footer_branch
      %27 = sbr.rel target = $region3
    $region8: #{tpu_custom_call.1} parent=1 // loop_exit
      _
    %942 = vsyncpa [#allocation3], 1
    %s943 = scalar_lea.sflag [#allocation3], 1
    %944 = vsyncpa %s943, 1
    %945 = vsyncpa [#allocation6], 1
    %s946 = scalar_lea.sflag [#allocation6], 1
    %947 = vsyncpa %s946, 1
    %948 = vsyncpa [#allocation9], 1
    %s949 = scalar_lea.sflag [#allocation9], 1
    %950 = vsyncpa %s949, 1
    %951 = vsyncpa [#allocation4], 1
    %s952 = scalar_lea.sflag [#allocation4], 1
    %953 = vsyncpa %s952, 1
    %954 = vsyncpa [#allocation13], 1
    %s955 = scalar_lea.sflag [#allocation13], 1
    %956 = vsyncpa %s955, 1

</llo_original>
